<compile_context>
chip_gen: v7x
topology: tpu7x:2x2x1
jax: 0.10.0
libtpu: 0.0.40
codegen_flags: <defaults>
</compile_context>

<pallas_src>
import functools

import jax
import jax.numpy as jnp
from jax import lax
from jax.experimental import pallas as pl
from jax.experimental.pallas import tpu as pltpu

_LANE = 128
_SUBLANE = 8
_MATMUL_DTYPE = jnp.bfloat16          # MXU operand dtype (accumulation stays f32)
_VMEM_LIMIT = 48 * 1024 * 1024        # explicit scoped-VMEM limit (headroom on v7x)


def _round_up(n, m):
    return ((n + m - 1) // m) * m


def _pick_tb(batch, cin_p, cout_p, budget_bytes=8 * 1024 * 1024):
    """Batch tile: double-buffered bf16 x tile + f32 h2 tile under `budget_bytes`."""
    per_row = 2 * (cin_p * 2 + cout_p * 4)      # 2x for double buffering
    tb = max(_SUBLANE, budget_bytes // max(per_row, 1))
    tb = min(tb, 1024)
    tb = max(_SUBLANE, (tb // _SUBLANE) * _SUBLANE)
    return min(tb, _round_up(batch, _SUBLANE))


# ---------------------------------------------------------------------------
# Kernel A: fc1 -> LeakyReLU -> fc2 -> LeakyReLU, plus per-feature sum / sumsq
# ---------------------------------------------------------------------------
def fc_stats_kernel(x_ref, w1_ref, b1_ref, w2_ref, b2_ref,
                    h2_ref, sum_ref, sq_ref, *, tb, batch):
    i = pl.program_id(0)

    @pl.when(i == 0)
    def _init():
        sum_ref[...] = jnp.zeros_like(sum_ref)
        sq_ref[...] = jnp.zeros_like(sq_ref)

    # fc1 + LeakyReLU(0.2): bf16 MXU operands, f32 accumulation / epilogue.
    h1 = jnp.dot(x_ref[...], w1_ref[...],
                 preferred_element_type=jnp.float32) + b1_ref[...]
    h1 = jnp.where(h1 > 0, h1, 0.2 * h1)

    # fc2 + LeakyReLU(0.2)
    h2 = jnp.dot(h1.astype(w2_ref.dtype), w2_ref[...],
                 preferred_element_type=jnp.float32) + b2_ref[...]
    h2 = jnp.where(h2 > 0, h2, 0.2 * h2)
    h2_ref[...] = h2

    # BatchNorm statistics in one pass (sum, sum of squares).  Batch-padding
    # rows are masked out so they never pollute the statistics.
    row = i * tb + lax.broadcasted_iota(jnp.int32, h2.shape, 0)
    h2m = jnp.where(row < batch, h2, 0.0)
    sum_ref[...] += jnp.sum(h2m, axis=0, keepdims=True)
    sq_ref[...] += jnp.sum(h2m * h2m, axis=0, keepdims=True)


# ---------------------------------------------------------------------------
# Kernel B: apply BatchNorm as a fused per-feature scale / shift
# ---------------------------------------------------------------------------
def bn_apply_kernel(h2_ref, sum_ref, sq_ref, gamma_ref, beta_ref, o_ref, *, batch):
    inv_n = 1.0 / batch
    mean = sum_ref[...] * inv_n
    var = jnp.maximum(sq_ref[...] * inv_n - mean * mean, 0.0)   # biased batch var
    scale = gamma_ref[...] * lax.rsqrt(var + 1e-5)
    shift = beta_ref[...] - mean * scale
    o_ref[...] = h2_ref[...] * scale + shift


# ---------------------------------------------------------------------------
# One-time parameter preparation (transpose, lane-pad to 128, cast to bf16)
# ---------------------------------------------------------------------------
def prepare_params(params, matmul_dtype=_MATMUL_DTYPE):
    hid, cin = params["w1"].shape
    cout = params["w2"].shape[0]
    cin_p, hid_p, cout_p = (_round_up(c, _LANE) for c in (cin, hid, cout))

    w1 = jnp.zeros((cin_p, hid_p), matmul_dtype)
    w1 = w1.at[:cin, :hid].set(params["w1"].T.astype(matmul_dtype))
    w2 = jnp.zeros((hid_p, cout_p), matmul_dtype)
    w2 = w2.at[:hid, :cout].set(params["w2"].T.astype(matmul_dtype))
    b1 = jnp.zeros((1, hid_p), jnp.float32).at[0, :hid].set(params["b1"])
    b2 = jnp.zeros((1, cout_p), jnp.float32).at[0, :cout].set(params["b2"])
    gamma = jnp.ones((1, cout_p), jnp.float32).at[0, :cout].set(params["gamma"])
    beta = jnp.zeros((1, cout_p), jnp.float32).at[0, :cout].set(params["beta"])
    return {"w1": w1, "b1": b1, "w2": w2, "b2": b2,
            "gamma": gamma, "beta": beta, "dims": (cin, hid, cout)}


# ---------------------------------------------------------------------------
# Forward wrapper
# ---------------------------------------------------------------------------
def glo_encoder(x, prep, *, tb=None):
    """x: (B, in_channels) float32.  prep: output of prepare_params()."""
    batch, cin = x.shape
    cin_d, _, cout_d = prep["dims"]
    assert cin == cin_d, "x feature dim does not match prepared params"
    cin_p = prep["w1"].shape[0]
    cout_p = prep["w2"].shape[1]

    if tb is None:
        tb = _pick_tb(batch, cin_p, cout_p)
    b_pad = _round_up(batch, tb)
    nbt = b_pad // tb

    # Pad batch (rows) and features (lanes); padded lanes have zero weights.
    x_p = jnp.zeros((b_pad, cin_p), prep["w1"].dtype)
    x_p = x_p.at[:batch, :cin].set(x.astype(prep["w1"].dtype))

    feat_spec = pl.BlockSpec((1, cout_p), lambda i: (0, 0))

    # Phase 1: MLP + per-feature statistics (batch axis carries the stats
    # accumulator -> "arbitrary").
    h2, fsum, fsq = pl.pallas_call(
        functools.partial(fc_stats_kernel, tb=tb, batch=batch),
        grid=(nbt,),
        in_specs=[
            pl.BlockSpec((tb, cin_p), lambda i: (i, 0)),
            pl.BlockSpec(prep["w1"].shape, lambda i: (0, 0)),
            pl.BlockSpec(prep["b1"].shape, lambda i: (0, 0)),
            pl.BlockSpec(prep["w2"].shape, lambda i: (0, 0)),
            pl.BlockSpec(prep["b2"].shape, lambda i: (0, 0)),
        ],
        out_specs=[
            pl.BlockSpec((tb, cout_p), lambda i: (i, 0)),
            feat_spec,
            feat_spec,
        ],
        out_shape=[
            jax.ShapeDtypeStruct((b_pad, cout_p), jnp.float32),
            jax.ShapeDtypeStruct((1, cout_p), jnp.float32),
            jax.ShapeDtypeStruct((1, cout_p), jnp.float32),
        ],
        compiler_params=pltpu.CompilerParams(
            dimension_semantics=("arbitrary",),
            vmem_limit_bytes=_VMEM_LIMIT,
        ),
    )(x_p, prep["w1"], prep["b1"], prep["w2"], prep["b2"])

    # Phase 2: fused BatchNorm scale/shift, batch tiles fully independent.
    out_p = pl.pallas_call(
        functools.partial(bn_apply_kernel, batch=batch),
        grid=(nbt,),
        in_specs=[
            pl.BlockSpec((tb, cout_p), lambda i: (i, 0)),
            feat_spec, feat_spec, feat_spec, feat_spec,
        ],
        out_specs=pl.BlockSpec((tb, cout_p), lambda i: (i, 0)),
        out_shape=jax.ShapeDtypeStruct((b_pad, cout_p), jnp.float32),
        compiler_params=pltpu.CompilerParams(
            dimension_semantics=("parallel",),
            vmem_limit_bytes=_VMEM_LIMIT,
        ),
    )(h2, fsum, fsq, prep["gamma"], prep["beta"])

    return out_p[:batch, :cout_d]


def init_params(key, in_channels, out_channels):
    """Deterministic synthetic parameters with PyTorch Linear/BatchNorm shapes."""
    hidden = in_channels // 2
    k1, k2, k3, k4 = jax.random.split(key, 4)
    bound1 = 1.0 / jnp.sqrt(in_channels)
    bound2 = 1.0 / jnp.sqrt(hidden)
    return {
        "w1": jax.random.uniform(k1, (hidden, in_channels), jnp.float32, -bound1, bound1),
        "b1": jax.random.uniform(k2, (hidden,), jnp.float32, -bound1, bound1),
        "w2": jax.random.uniform(k3, (out_channels, hidden), jnp.float32, -bound2, bound2),
        "b2": jax.random.uniform(k4, (out_channels,), jnp.float32, -bound2, bound2),
        "gamma": jnp.ones((out_channels,), jnp.float32),
        "beta": jnp.zeros((out_channels,), jnp.float32),
    }


if __name__ == "__main__":
    key = jax.random.PRNGKey(0)
    kx, kp = jax.random.split(key)

    B, in_channels, out_channels = 8, 32, 16
    x = jax.random.normal(kx, (B, in_channels), jnp.float32)
    params = init_params(kp, in_channels, out_channels)
    prep = prepare_params(params)            # one-time: transpose / pad / cast

    out = glo_encoder(x, prep)
    jax.block_until_ready(out)
    assert out.shape == (B, out_channels)

    # Reference with identical math (bf16 MXU operands, f32 accumulation/epilogue).
    bf = _MATMUL_DTYPE
    h1 = jnp.dot(x.astype(bf), params["w1"].T.astype(bf),
                 preferred_element_type=jnp.float32) + params["b1"]
    h1 = jnp.where(h1 > 0, h1, 0.2 * h1)
    h2 = jnp.dot(h1.astype(bf), params["w2"].T.astype(bf),
                 preferred_element_type=jnp.float32) + params["b2"]
    h2 = jnp.where(h2 > 0, h2, 0.2 * h2)
    mu = h2.mean(0, keepdims=True)
    var = ((h2 - mu) ** 2).mean(0, keepdims=True)
    ref = params["gamma"] * (h2 - mu) / jnp.sqrt(var + 1e-5) + params["beta"]
    assert jnp.allclose(out, ref, atol=2e-3, rtol=2e-3), \
        float(jnp.max(jnp.abs(out - ref)))

    # Loose check against full-f32 PyTorch math (gap is only bf16 operand rounding).
    h1f = x @ params["w1"].T + params["b1"]
    h1f = jnp.where(h1f > 0, h1f, 0.2 * h1f)
    h2f = h1f @ params["w2"].T + params["b2"]
    h2f = jnp.where(h2f > 0, h2f, 0.2 * h2f)
    muf = h2f.mean(0, keepdims=True)
    varf = ((h2f - muf) ** 2).mean(0, keepdims=True)
    reff = params["gamma"] * (h2f - muf) / jnp.sqrt(varf + 1e-5) + params["beta"]
    assert jnp.allclose(out, reff, atol=1e-1, rtol=1e-1)

    print("KERNEL_OK")
</pallas_src>

<mosaic_0001>
module attributes {stable_mosaic.version = 11 : i64} {
  func.func @fc_stats_kernel(%arg0: i32, %arg1: memref<8x128xbf16, #tpu.memory_space<vmem>>, %arg2: memref<128x128xbf16, #tpu.memory_space<vmem>>, %arg3: memref<1x128xf32, #tpu.memory_space<vmem>>, %arg4: memref<128x128xbf16, #tpu.memory_space<vmem>>, %arg5: memref<1x128xf32, #tpu.memory_space<vmem>>, %arg6: memref<8x128xf32, #tpu.memory_space<vmem>>, %arg7: memref<1x128xf32, #tpu.memory_space<vmem>>, %arg8: memref<1x128xf32, #tpu.memory_space<vmem>>) attributes {dimension_semantics = [#tpu.dimension_semantics<arbitrary>], iteration_bounds = array<i64: 1>, scalar_prefetch = 0 : i64, scratch_operands = 0 : i64, tpu.core_type = #tpu.core_type<tc>, window_params = [{transform_indices = @transform_0, window_bounds = array<i64: 8, 128>}, {pipeline_mode = #tpu.pipeline_mode<synchronous>, transform_indices = @transform_1, window_bounds = array<i64: 128, 128>}, {pipeline_mode = #tpu.pipeline_mode<synchronous>, transform_indices = @transform_2, window_bounds = array<i64: 1, 128>}, {pipeline_mode = #tpu.pipeline_mode<synchronous>, transform_indices = @transform_3, window_bounds = array<i64: 128, 128>}, {pipeline_mode = #tpu.pipeline_mode<synchronous>, transform_indices = @transform_4, window_bounds = array<i64: 1, 128>}, {transform_indices = @transform_5, window_bounds = array<i64: 8, 128>}, {pipeline_mode = #tpu.pipeline_mode<synchronous>, transform_indices = @transform_6, window_bounds = array<i64: 1, 128>}, {pipeline_mode = #tpu.pipeline_mode<synchronous>, transform_indices = @transform_7, window_bounds = array<i64: 1, 128>}]} {
    %c0_i32 = arith.constant 0 : i32
    %0 = arith.cmpi eq, %arg0, %c0_i32 : i32
    %1 = arith.extui %0 : i1 to i32
    %c0_i32_0 = arith.constant 0 : i32
    %2 = arith.cmpi ne, %1, %c0_i32_0 : i32
    scf.if %2 {
      %cst_29 = arith.constant 0.000000e+00 : f32
      %45 = vector.broadcast %cst_29 : f32 to vector<1x128xf32>
      %c0_30 = arith.constant 0 : index
      %c0_31 = arith.constant 0 : index
      %46 = vector.load %arg7[%c0_30, %c0_31] : memref<1x128xf32, #tpu.memory_space<vmem>>, vector<1x128xf32>
      tpu.vector_store %arg7[%c0_30, %c0_31], %45 {strides = array<i32>} : memref<1x128xf32, #tpu.memory_space<vmem>>, vector<1x128xf32>,
      %cst_32 = arith.constant 0.000000e+00 : f32
      %47 = vector.broadcast %cst_32 : f32 to vector<1x128xf32>
      %c0_33 = arith.constant 0 : index
      %c0_34 = arith.constant 0 : index
      %48 = vector.load %arg8[%c0_33, %c0_34] : memref<1x128xf32, #tpu.memory_space<vmem>>, vector<1x128xf32>
      tpu.vector_store %arg8[%c0_33, %c0_34], %47 {strides = array<i32>} : memref<1x128xf32, #tpu.memory_space<vmem>>, vector<1x128xf32>,
    } else {
    }
    %c0 = arith.constant 0 : index
    %c0_1 = arith.constant 0 : index
    %3 = vector.load %arg1[%c0, %c0_1] : memref<8x128xbf16, #tpu.memory_space<vmem>>, vector<8x128xbf16>
    %c0_2 = arith.constant 0 : index
    %c0_3 = arith.constant 0 : index
    %4 = vector.load %arg2[%c0_2, %c0_3] : memref<128x128xbf16, #tpu.memory_space<vmem>>, vector<128x128xbf16>
    %cst = arith.constant dense<0.000000e+00> : vector<8x128xf32>
    %5 = tpu.matmul %3, %4, %cst {dimension_numbers = #tpu.dot_dimension_numbers<[1], [0], [0], [1], [0, 0, 1, 1], [], []>} : vector<8x128xbf16>, vector<128x128xbf16>, vector<8x128xf32> -> vector<8x128xf32>
    %c0_4 = arith.constant 0 : index
    %c0_5 = arith.constant 0 : index
    %6 = vector.load %arg3[%c0_4, %c0_5] : memref<1x128xf32, #tpu.memory_space<vmem>>, vector<1x128xf32>
    %7 = vector.broadcast %6 : vector<1x128xf32> to vector<8x128xf32>
    %8 = arith.addf %5, %7 : vector<8x128xf32>
    %cst_6 = arith.constant 0.000000e+00 : f32
    %9 = vector.broadcast %cst_6 : f32 to vector<8x128xf32>
    %10 = arith.cmpf ogt, %8, %9 : vector<8x128xf32>
    %cst_7 = arith.constant 2.000000e-01 : f32
    %11 = vector.broadcast %cst_7 : f32 to vector<8x128xf32>
    %12 = arith.mulf %11, %8 : vector<8x128xf32>
    %13 = arith.select %10, %8, %12 : vector<8x128xi1>, vector<8x128xf32>
    %14 = arith.truncf %13 : vector<8x128xf32> to vector<8x128xbf16>
    %c0_8 = arith.constant 0 : index
    %c0_9 = arith.constant 0 : index
    %15 = vector.load %arg4[%c0_8, %c0_9] : memref<128x128xbf16, #tpu.memory_space<vmem>>, vector<128x128xbf16>
    %cst_10 = arith.constant dense<0.000000e+00> : vector<8x128xf32>
    %16 = tpu.matmul %14, %15, %cst_10 {dimension_numbers = #tpu.dot_dimension_numbers<[1], [0], [0], [1], [0, 0, 1, 1], [], []>} : vector<8x128xbf16>, vector<128x128xbf16>, vector<8x128xf32> -> vector<8x128xf32>
    %c0_11 = arith.constant 0 : index
    %c0_12 = arith.constant 0 : index
    %17 = vector.load %arg5[%c0_11, %c0_12] : memref<1x128xf32, #tpu.memory_space<vmem>>, vector<1x128xf32>
    %18 = vector.broadcast %17 : vector<1x128xf32> to vector<8x128xf32>
    %19 = arith.addf %16, %18 : vector<8x128xf32>
    %cst_13 = arith.constant 0.000000e+00 : f32
    %20 = vector.broadcast %cst_13 : f32 to vector<8x128xf32>
    %21 = arith.cmpf ogt, %19, %20 : vector<8x128xf32>
    %cst_14 = arith.constant 2.000000e-01 : f32
    %22 = vector.broadcast %cst_14 : f32 to vector<8x128xf32>
    %23 = arith.mulf %22, %19 : vector<8x128xf32>
    %24 = arith.select %21, %19, %23 : vector<8x128xi1>, vector<8x128xf32>
    %c0_15 = arith.constant 0 : index
    %c0_16 = arith.constant 0 : index
    %25 = vector.load %arg6[%c0_15, %c0_16] : memref<8x128xf32, #tpu.memory_space<vmem>>, vector<8x128xf32>
    tpu.vector_store %arg6[%c0_15, %c0_16], %24 {strides = array<i32>} : memref<8x128xf32, #tpu.memory_space<vmem>>, vector<8x128xf32>,
    %c8_i32 = arith.constant 8 : i32
    %26 = arith.muli %arg0, %c8_i32 : i32
    %27 = tpu.iota {dimensions = array<i32: 0>} : vector<8x128xi32>
    %28 = vector.broadcast %26 : i32 to vector<8x128xi32>
    %29 = arith.addi %28, %27 : vector<8x128xi32>
    %c8_i32_17 = arith.constant 8 : i32
    %30 = vector.broadcast %c8_i32_17 : i32 to vector<8x128xi32>
    %31 = arith.cmpi slt, %29, %30 : vector<8x128xi32>
    %cst_18 = arith.constant 0.000000e+00 : f32
    %32 = vector.broadcast %cst_18 : f32 to vector<8x128xf32>
    %33 = arith.select %31, %24, %32 : vector<8x128xi1>, vector<8x128xf32>
    %c0_19 = arith.constant 0 : index
    %c0_20 = arith.constant 0 : index
    %34 = vector.load %arg7[%c0_19, %c0_20] : memref<1x128xf32, #tpu.memory_space<vmem>>, vector<1x128xf32>
    %cst_21 = arith.constant dense<0.000000e+00> : vector<128xf32>
    %35 = vector.multi_reduction <add>, %33, %cst_21 [0] : vector<8x128xf32> to vector<128xf32>
    %36 = vector.shape_cast %35 : vector<128xf32> to vector<1x128xf32>
    %37 = arith.addf %34, %36 : vector<1x128xf32>
    %c0_22 = arith.constant 0 : index
    %c0_23 = arith.constant 0 : index
    %38 = vector.load %arg7[%c0_22, %c0_23] : memref<1x128xf32, #tpu.memory_space<vmem>>, vector<1x128xf32>
    tpu.vector_store %arg7[%c0_22, %c0_23], %37 {strides = array<i32>} : memref<1x128xf32, #tpu.memory_space<vmem>>, vector<1x128xf32>,
    %c0_24 = arith.constant 0 : index
    %c0_25 = arith.constant 0 : index
    %39 = vector.load %arg8[%c0_24, %c0_25] : memref<1x128xf32, #tpu.memory_space<vmem>>, vector<1x128xf32>
    %40 = arith.mulf %33, %33 : vector<8x128xf32>
    %cst_26 = arith.constant dense<0.000000e+00> : vector<128xf32>
    %41 = vector.multi_reduction <add>, %40, %cst_26 [0] : vector<8x128xf32> to vector<128xf32>
    %42 = vector.shape_cast %41 : vector<128xf32> to vector<1x128xf32>
    %43 = arith.addf %39, %42 : vector<1x128xf32>
    %c0_27 = arith.constant 0 : index
    %c0_28 = arith.constant 0 : index
    %44 = vector.load %arg8[%c0_27, %c0_28] : memref<1x128xf32, #tpu.memory_space<vmem>>, vector<1x128xf32>
    tpu.vector_store %arg8[%c0_27, %c0_28], %43 {strides = array<i32>} : memref<1x128xf32, #tpu.memory_space<vmem>>, vector<1x128xf32>,
    return
  }
  func.func @transform_0(%arg0: i32) -> (i32, i32) {
    %c0_i32 = arith.constant 0 : i32
    %c0_i32_0 = arith.constant 0 : i32
    return %arg0, %c0_i32 : i32, i32
  }
  func.func @transform_1(%arg0: i32) -> (i32, i32) {
    %c0_i32 = arith.constant 0 : i32
    %c0_i32_0 = arith.constant 0 : i32
    %c0_i32_1 = arith.constant 0 : i32
    return %c0_i32, %c0_i32_0 : i32, i32
  }
  func.func @transform_2(%arg0: i32) -> (i32, i32) {
    %c0_i32 = arith.constant 0 : i32
    %c0_i32_0 = arith.constant 0 : i32
    %c0_i32_1 = arith.constant 0 : i32
    return %c0_i32, %c0_i32_0 : i32, i32
  }
  func.func @transform_3(%arg0: i32) -> (i32, i32) {
    %c0_i32 = arith.constant 0 : i32
    %c0_i32_0 = arith.constant 0 : i32
    %c0_i32_1 = arith.constant 0 : i32
    return %c0_i32, %c0_i32_0 : i32, i32
  }
  func.func @transform_4(%arg0: i32) -> (i32, i32) {
    %c0_i32 = arith.constant 0 : i32
    %c0_i32_0 = arith.constant 0 : i32
    %c0_i32_1 = arith.constant 0 : i32
    return %c0_i32, %c0_i32_0 : i32, i32
  }
  func.func @transform_5(%arg0: i32) -> (i32, i32) {
    %c0_i32 = arith.constant 0 : i32
    %c0_i32_0 = arith.constant 0 : i32
    return %arg0, %c0_i32 : i32, i32
  }
  func.func @transform_6(%arg0: i32) -> (i32, i32) {
    %c0_i32 = arith.constant 0 : i32
    %c0_i32_0 = arith.constant 0 : i32
    %c0_i32_1 = arith.constant 0 : i32
    return %c0_i32, %c0_i32_0 : i32, i32
  }
  func.func @transform_7(%arg0: i32) -> (i32, i32) {
    %c0_i32 = arith.constant 0 : i32
    %c0_i32_0 = arith.constant 0 : i32
    %c0_i32_1 = arith.constant 0 : i32
    return %c0_i32, %c0_i32_0 : i32, i32
  }
}

</mosaic_0001>

<llo_original>
// kernel: tpu_custom_call.1
$region0: #{tpu_custom_call.1}
  #allocation0 [shape = 'u32[]', space=smem, size = 0x4, offset = 0x4, fixed_abs, tag = 'smem constant byte address 0x4 - core index']
  #allocation1 [shape = 'u32[144,128]{1,0:T(1,128)}', space=vmem, size = 0x12000, scoped, tag = 'internal scratch']
  %s0 = inlined_call_operand.hbm [shape: bf16[8,128], index: 0, kind: input, shape index: {}]
  %s1 = inlined_call_operand.hbm [shape: bf16[128,128], index: 1, kind: input, shape index: {}]
  %s2 = inlined_call_operand.vmem [shape: f32[1,128], index: 2, kind: input, shape index: {}]
  %s3 = inlined_call_operand.hbm [shape: bf16[128,128], index: 3, kind: input, shape index: {}]
  %s4 = inlined_call_operand.vmem [shape: f32[1,128], index: 4, kind: input, shape index: {}]
  %s5 = inlined_call_operand.hbm [shape: f32[8,128], index: 5, kind: output, shape index: {0}]
  %s6 = inlined_call_operand.hbm [shape: f32[1,128], index: 6, kind: output, shape index: {1}]
  %s7 = inlined_call_operand.hbm [shape: f32[1,128], index: 7, kind: output, shape index: {2}]
  %8 = xla_tuple %s5, %s6, %s7
  %s9 = sld [smem:[#allocation0]]
  $region62: #{tpu_custom_call.1} parent=0
    _
  %s11 = ssub.s32 1, %s9
  %s12 = scalar_select 0, %s11, %s9
  $region1: #{tpu_custom_call.1} parent=0
    #allocation2 [shape = 'u8[2048]{0}', space=vmem, size = 0x800, scoped, tag = 'input window, operand 0, single buffered']
    #allocation3 [shape = 's32[1]{0}', space=sflag, size = 0x4, scoped, tag = 'scoped memory for tpu_custom_call.1']
    #allocation4 [shape = 's32[1]{0}', space=sflag, size = 0x4, scoped, tag = 'scoped memory for tpu_custom_call.1']
    #allocation5 [shape = 'u8[32768]{0}', space=vmem, size = 0x8000, scoped, tag = 'input window, operand 1, single buffered']
    #allocation6 [shape = 's32[1]{0}', space=sflag, size = 0x4, scoped, tag = 'scoped memory for tpu_custom_call.1']
    #allocation7 [shape = 'u8[32768]{0}', space=vmem, size = 0x8000, scoped, tag = 'input window, operand 3, single buffered']
    #allocation8 [shape = 'u8[4096]{0}', space=vmem, size = 0x1000, scoped, tag = 'output window, operand 0, single buffered']
    #allocation9 [shape = 'u8[512]{0}', space=vmem, size = 0x400, scoped, tag = 'output window, operand 1, single buffered']
    #allocation10 [shape = 's32[1]{0}', space=sflag, size = 0x4, scoped, tag = 'scoped memory for tpu_custom_call.1']
    #allocation11 [shape = 'u8[512]{0}', space=vmem, size = 0x400, scoped, tag = 'output window, operand 2, single buffered']
    %13 = vsyncpa [#allocation3], 0
    %14 = vsyncpa [#allocation6], 0
    %15 = vsyncpa [#allocation4], 0
    %16 = vsyncpa [#allocation10], 0
    // Predicated region
    $region2: #{tpu_custom_call.1} parent=1 // pred_check
      _
    $region3: #{tpu_custom_call.1} parent=1 // pred_check_branch
      %18 = sbr.rel (0) target = $region5
    $region4: #{tpu_custom_call.1} parent=1 // pred_region
      %s20 = ssub.s32 64, 64
      %21 = vsyncadd [#allocation3], %s20
      %s23 = sshll.u32 [#allocation2], 4
      %s24 = int_to_ptr.vmem [resolvable:$true] %s23
      %26 = dma.hbm_to_vmem [thread:$0]  %s0, 64, %s24, [#allocation3]
    $region5: #{tpu_custom_call.1} parent=1 // pred_fallthru
      _
    // Predicated region
    $region6: #{tpu_custom_call.1} parent=1 // pred_check
      _
    $region7: #{tpu_custom_call.1} parent=1 // pred_check_branch
      %28 = sbr.rel (0) target = $region9
    $region8: #{tpu_custom_call.1} parent=1 // pred_region
      %s30 = ssub.s32 1024, 1024
      %31 = vsyncadd [#allocation6], %s30
      %s32 = sshll.u32 [#allocation5], 4
      %s33 = int_to_ptr.vmem [resolvable:$true] %s32
      %38 = dma.hbm_to_vmem [thread:$0]  %s1, 1024, %s33, [#allocation6], 64, 64, 4
    $region9: #{tpu_custom_call.1} parent=1 // pred_fallthru
      _
    // Predicated region
    $region10: #{tpu_custom_call.1} parent=1 // pred_check
      _
    $region11: #{tpu_custom_call.1} parent=1 // pred_check_branch
      %40 = sbr.rel (0) target = $region13
    $region12: #{tpu_custom_call.1} parent=1 // pred_region
      _
    $region13: #{tpu_custom_call.1} parent=1 // pred_fallthru
      _
    // Predicated region
    $region14: #{tpu_custom_call.1} parent=1 // pred_check
      _
    $region15: #{tpu_custom_call.1} parent=1 // pred_check_branch
      %42 = sbr.rel (0) target = $region17
    $region16: #{tpu_custom_call.1} parent=1 // pred_region
      %s44 = ssub.s32 1024, 1024
      %45 = vsyncadd [#allocation6], %s44
      %s46 = sshll.u32 [#allocation7], 4
      %s47 = int_to_ptr.vmem [resolvable:$true] %s46
      %52 = dma.hbm_to_vmem [thread:$0]  %s3, 1024, %s47, [#allocation6], 64, 64, 4
    $region17: #{tpu_custom_call.1} parent=1 // pred_fallthru
      _
    // Predicated region
    $region18: #{tpu_custom_call.1} parent=1 // pred_check
      _
    $region19: #{tpu_custom_call.1} parent=1 // pred_check_branch
      %54 = sbr.rel (0) target = $region21
    $region20: #{tpu_custom_call.1} parent=1 // pred_region
      _
    $region21: #{tpu_custom_call.1} parent=1 // pred_fallthru
      _
    // Predicated region
    $region22: #{tpu_custom_call.1} parent=1 // pred_check
      _
    $region23: #{tpu_custom_call.1} parent=1 // pred_check_branch
      %56 = sbr.rel (0) target = $region25
    $region24: #{tpu_custom_call.1} parent=1 // pred_region
      %57 = dma.done [#allocation3], 64
    $region25: #{tpu_custom_call.1} parent=1 // pred_fallthru
      _
    // Predicated region
    $region26: #{tpu_custom_call.1} parent=1 // pred_check
      _
    $region27: #{tpu_custom_call.1} parent=1 // pred_check_branch
      %59 = sbr.rel (0) target = $region29
    $region28: #{tpu_custom_call.1} parent=1 // pred_region
      %60 = dma.done [#allocation6], 1024
    $region29: #{tpu_custom_call.1} parent=1 // pred_fallthru
      _
    // Predicated region
    $region30: #{tpu_custom_call.1} parent=1 // pred_check
      _
    $region31: #{tpu_custom_call.1} parent=1 // pred_check_branch
      %62 = sbr.rel (0) target = $region33
    $region32: #{tpu_custom_call.1} parent=1 // pred_region
      %63 = dma.done [#allocation6], 1024
    $region33: #{tpu_custom_call.1} parent=1 // pred_fallthru
      _
    %p65 = scmp.eq.s32.totalorder 0, 0
    // Predicated region
    $region34: #{tpu_custom_call.1} parent=1 // pred_check
      %p66 = pneg %p65
    $region35: #{tpu_custom_call.1} parent=1 // pred_check_branch
      %68 = sbr.rel (%p66) target = $region37
    $region36: #{tpu_custom_call.1} parent=1 // pred_region
      %69 = vst [vmem:[#allocation9] sm:$0x1] 0.0
      %70 = vst [vmem:[#allocation11] sm:$0x1] 0.0
    $region37: #{tpu_custom_call.1} parent=1 // pred_fallthru
      _
    %v71 = vld [vmem:[#allocation2] sm:$0xf]
    %v72 = vld [vmem:[#allocation5] sm:$0xf]
    %v73 = vld [vmem:[#allocation5 + $0x4] sm:$0xf]
    %v74 = vld [vmem:[#allocation5 + $0x8] sm:$0xf]
    %v75 = vld [vmem:[#allocation5 + $0xc] sm:$0xf]
    %v76 = vld [vmem:[#allocation5 + $0x10] sm:$0xf]
    %v77 = vld [vmem:[#allocation5 + $0x14] sm:$0xf]
    %v78 = vld [vmem:[#allocation5 + $0x18] sm:$0xf]
    %v79 = vld [vmem:[#allocation5 + $0x1c] sm:$0xf]
    %v80 = vld [vmem:[#allocation5 + $0x20] sm:$0xf]
    %v81 = vld [vmem:[#allocation5 + $0x24] sm:$0xf]
    %v82 = vld [vmem:[#allocation5 + $0x28] sm:$0xf]
    %v83 = vld [vmem:[#allocation5 + $0x2c] sm:$0xf]
    %v84 = vld [vmem:[#allocation5 + $0x30] sm:$0xf]
    %v85 = vld [vmem:[#allocation5 + $0x34] sm:$0xf]
    %v86 = vld [vmem:[#allocation5 + $0x38] sm:$0xf]
    %v87 = vld [vmem:[#allocation5 + $0x3c] sm:$0xf]
    %v88 = vld [vmem:[%s2] sm:$0x1]
    %v90 = vlaneseq
    %v91 = vshrl.u32 %v90, 7
    %v92 = vsub.s32 0, %v91
    %v93 = vrot.slane %v88, %v92
    %v111 = vunpack.c.l.b16 %v72
    %v112 = vunpack.c.l.b16 %v73
    %v113 = vunpack.c.l.b16 %v74
    %v114 = vunpack.c.l.b16 %v75
    %v115 = vunpack.c.l.b16 %v76
    %v116 = vunpack.c.l.b16 %v77
    %v117 = vunpack.c.l.b16 %v78
    %v118 = vunpack.c.l.b16 %v79
    %v119 = vunpack.c.l.b16 %v80
    %v120 = vunpack.c.l.b16 %v81
    %v121 = vunpack.c.l.b16 %v82
    %v122 = vunpack.c.l.b16 %v83
    %v123 = vunpack.c.l.b16 %v84
    %v124 = vunpack.c.l.b16 %v85
    %v125 = vunpack.c.l.b16 %v86
    %v126 = vunpack.c.l.b16 %v87
    %v127 = vpack.c.b16 %v112, %v111
    %v128 = vpack.c.b16 %v114, %v113
    %v129 = vpack.c.b16 %v116, %v115
    %v130 = vpack.c.b16 %v118, %v117
    %v131 = vpack.c.b16 %v120, %v119
    %v132 = vpack.c.b16 %v122, %v121
    %v133 = vpack.c.b16 %v124, %v123
    %v134 = vpack.c.b16 %v126, %v125
    %143 = vmatprep.subr.bf16.mxu0 0
    %144 = vmatpush1.bf16.msra.mxu0 %v127
    %145 = vmatprep.subr.bf16.mxu0 0
    %146 = vmatpush1.bf16.msra.mxu0 %v128
    %147 = vmatprep.subr.bf16.mxu0 0
    %148 = vmatpush1.bf16.msra.mxu0 %v129
    %149 = vmatprep.subr.bf16.mxu0 0
    %150 = vmatpush1.bf16.msra.mxu0 %v130
    %151 = vmatprep.subr.bf16.mxu0 0
    %152 = vmatpush1.bf16.msra.mxu0 %v131
    %153 = vmatprep.subr.bf16.mxu0 0
    %154 = vmatpush1.bf16.msra.mxu0 %v132
    %155 = vmatprep.subr.bf16.mxu0 0
    %156 = vmatpush1.bf16.msra.mxu0 %v133
    %157 = vmatprep.subr.bf16.mxu0 0
    %158 = vmatpush1.bf16.msra.mxu0 %v134
    %159 = vmatprep.subr.bf16.mxu0 0
    %160 = vmatpush1.bf16.msra.mxu0 0
    %161 = vmatprep.subr.bf16.mxu0 0
    %162 = vmatpush1.bf16.msra.mxu0 0
    %163 = vmatprep.subr.bf16.mxu0 0
    %164 = vmatpush1.bf16.msra.mxu0 0
    %165 = vmatprep.subr.bf16.mxu0 0
    %166 = vmatpush1.bf16.msra.mxu0 0
    %167 = vmatprep.subr.bf16.mxu0 0
    %168 = vmatpush1.bf16.msra.mxu0 0
    %169 = vmatprep.subr.bf16.mxu0 0
    %170 = vmatpush1.bf16.msra.mxu0 0
    %171 = vmatprep.subr.bf16.mxu0 0
    %172 = vmatpush1.bf16.msra.mxu0 0
    %173 = vmatprep.subr.bf16.mxu0 0
    %174 = vmatpush1.bf16.msra.mxu0 0
    %175 = vmatprep.mubr.bf16.mxu0 0
    %176 = vmatmul.mubr.bf16.gmra.mrb[0].mxu0 %v71
    %v177 = vpop.f32.mrb[0].mxu0
    %v178 = vadd.f32 %v93, %v177
    %v179 = vpop.f32.mrb[0].mxu0
    %v180 = vpop.f32.mrb[0].mxu0
    %v181 = vpop.f32.mrb[0].mxu0
    %182 = vdwg.mxu0
    %vm183 = vcmp.gt.f32.partialorder %v178, 0.0
    %v184 = vmul.f32 %v178, 0.2
    %v185 = vsel %vm183, %v178, %v184
    %v186 = vpack.c.bf16 %v185, %v185
    %v187 = vld [vmem:[#allocation7] sm:$0xf]
    %v188 = vld [vmem:[#allocation7 + $0x4] sm:$0xf]
    %v189 = vld [vmem:[#allocation7 + $0x8] sm:$0xf]
    %v190 = vld [vmem:[#allocation7 + $0xc] sm:$0xf]
    %v191 = vld [vmem:[#allocation7 + $0x10] sm:$0xf]
    %v192 = vld [vmem:[#allocation7 + $0x14] sm:$0xf]
    %v193 = vld [vmem:[#allocation7 + $0x18] sm:$0xf]
    %v194 = vld [vmem:[#allocation7 + $0x1c] sm:$0xf]
    %v195 = vld [vmem:[#allocation7 + $0x20] sm:$0xf]
    %v196 = vld [vmem:[#allocation7 + $0x24] sm:$0xf]
    %v197 = vld [vmem:[#allocation7 + $0x28] sm:$0xf]
    %v198 = vld [vmem:[#allocation7 + $0x2c] sm:$0xf]
    %v199 = vld [vmem:[#allocation7 + $0x30] sm:$0xf]
    %v200 = vld [vmem:[#allocation7 + $0x34] sm:$0xf]
    %v201 = vld [vmem:[#allocation7 + $0x38] sm:$0xf]
    %v202 = vld [vmem:[#allocation7 + $0x3c] sm:$0xf]
    %v203 = vld [vmem:[%s4] sm:$0x1]
    %v205 = vlaneseq
    %v206 = vshrl.u32 %v205, 7
    %v207 = vsub.s32 0, %v206
    %v208 = vrot.slane %v203, %v207
    %v226 = vunpack.c.l.b16 %v187
    %v227 = vunpack.c.l.b16 %v188
    %v228 = vunpack.c.l.b16 %v189
    %v229 = vunpack.c.l.b16 %v190
    %v230 = vunpack.c.l.b16 %v191
    %v231 = vunpack.c.l.b16 %v192
    %v232 = vunpack.c.l.b16 %v193
    %v233 = vunpack.c.l.b16 %v194
    %v234 = vunpack.c.l.b16 %v195
    %v235 = vunpack.c.l.b16 %v196
    %v236 = vunpack.c.l.b16 %v197
    %v237 = vunpack.c.l.b16 %v198
    %v238 = vunpack.c.l.b16 %v199
    %v239 = vunpack.c.l.b16 %v200
    %v240 = vunpack.c.l.b16 %v201
    %v241 = vunpack.c.l.b16 %v202
    %v242 = vpack.c.b16 %v227, %v226
    %v243 = vpack.c.b16 %v229, %v228
    %v244 = vpack.c.b16 %v231, %v230
    %v245 = vpack.c.b16 %v233, %v232
    %v246 = vpack.c.b16 %v235, %v234
    %v247 = vpack.c.b16 %v237, %v236
    %v248 = vpack.c.b16 %v239, %v238
    %v249 = vpack.c.b16 %v241, %v240
    %258 = vmatprep.subr.bf16.mxu0 0
    %259 = vmatpush1.bf16.msra.mxu0 %v242
    %260 = vmatprep.subr.bf16.mxu0 0
    %261 = vmatpush1.bf16.msra.mxu0 %v243
    %262 = vmatprep.subr.bf16.mxu0 0
    %263 = vmatpush1.bf16.msra.mxu0 %v244
    %264 = vmatprep.subr.bf16.mxu0 0
    %265 = vmatpush1.bf16.msra.mxu0 %v245
    %266 = vmatprep.subr.bf16.mxu0 0
    %267 = vmatpush1.bf16.msra.mxu0 %v246
    %268 = vmatprep.subr.bf16.mxu0 0
    %269 = vmatpush1.bf16.msra.mxu0 %v247
    %270 = vmatprep.subr.bf16.mxu0 0
    %271 = vmatpush1.bf16.msra.mxu0 %v248
    %272 = vmatprep.subr.bf16.mxu0 0
    %273 = vmatpush1.bf16.msra.mxu0 %v249
    %274 = vmatprep.subr.bf16.mxu0 0
    %275 = vmatpush1.bf16.msra.mxu0 0
    %276 = vmatprep.subr.bf16.mxu0 0
    %277 = vmatpush1.bf16.msra.mxu0 0
    %278 = vmatprep.subr.bf16.mxu0 0
    %279 = vmatpush1.bf16.msra.mxu0 0
    %280 = vmatprep.subr.bf16.mxu0 0
    %281 = vmatpush1.bf16.msra.mxu0 0
    %282 = vmatprep.subr.bf16.mxu0 0
    %283 = vmatpush1.bf16.msra.mxu0 0
    %284 = vmatprep.subr.bf16.mxu0 0
    %285 = vmatpush1.bf16.msra.mxu0 0
    %286 = vmatprep.subr.bf16.mxu0 0
    %287 = vmatpush1.bf16.msra.mxu0 0
    %288 = vmatprep.subr.bf16.mxu0 0
    %289 = vmatpush1.bf16.msra.mxu0 0
    %290 = vmatprep.mubr.bf16.mxu0 0
    %291 = vmatmul.mubr.bf16.gmra.mrb[0].mxu0 %v186
    %v292 = vpop.f32.mrb[0].mxu0
    %v293 = vadd.f32 %v208, %v292
    %v294 = vpop.f32.mrb[0].mxu0
    %v295 = vpop.f32.mrb[0].mxu0
    %v296 = vpop.f32.mrb[0].mxu0
    %297 = vdwg.mxu0
    %vm298 = vcmp.gt.f32.partialorder %v293, 0.0
    %v299 = vmul.f32 %v293, 0.2
    %v300 = vsel %vm298, %v293, %v299
    %301 = vst [vmem:[#allocation8] sm:$0xff] %v300
    %s302 = smul.u32 0, 8
    %v303 = vlaneseq
    %v304 = vshrl.u32 %v303, 7
    %v305 = vstv %s302
    %v306 = vadd.s32 %v305, %v304
    %vm307 = vcmp.lt.s32.totalorder %v306, 8
    %v308 = vsel %vm307, %v300, 0.0
    %v309 = vld [vmem:[#allocation9] sm:$0x1]
    %v310 = vrot.slane %v308, 4
    %v311 = vadd.f32 %v308, %v310
    %v312 = vrot.slane %v311, 2
    %v313 = vadd.f32 %v311, %v312
    %v314 = vrot.slane %v313, 1
    %v315 = vadd.f32 %v313, %v314
    %v316 = vadd.f32 %v309, %v315
    %317 = vst [vmem:[#allocation9] sm:$0x1] %v316
    %v318 = vld [vmem:[#allocation11] sm:$0x1]
    %v319 = vmul.f32 %v308, %v308
    %v320 = vrot.slane %v319, 4
    %v321 = vadd.f32 %v319, %v320
    %v322 = vrot.slane %v321, 2
    %v323 = vadd.f32 %v321, %v322
    %v324 = vrot.slane %v323, 1
    %v325 = vadd.f32 %v323, %v324
    %v326 = vadd.f32 %v318, %v325
    %327 = vst [vmem:[#allocation11] sm:$0x1] %v326
    // Predicated region
    $region38: #{tpu_custom_call.1} parent=1 // pred_check
      _
    $region39: #{tpu_custom_call.1} parent=1 // pred_check_branch
      %329 = sbr.rel (0) target = $region41
    $region40: #{tpu_custom_call.1} parent=1 // pred_region
      %s331 = ssub.s32 128, 128
      %332 = vsyncadd [#allocation4], %s331
      %s334 = sshll.u32 [#allocation8], 4
      %s335 = int_to_ptr.vmem [resolvable:$true] %s334
      %337 = dma.vmem_to_hbm [thread:$0]  %s335, 128, %s5, [#allocation4]
    $region41: #{tpu_custom_call.1} parent=1 // pred_fallthru
      _
    // Predicated region
    $region42: #{tpu_custom_call.1} parent=1 // pred_check
      _
    $region43: #{tpu_custom_call.1} parent=1 // pred_check_branch
      %339 = sbr.rel (0) target = $region45
    $region44: #{tpu_custom_call.1} parent=1 // pred_region
      %s341 = ssub.s32 16, 16
      %342 = vsyncadd [#allocation10], %s341
      %s344 = sshll.u32 [#allocation9], 4
      %s345 = int_to_ptr.vmem [resolvable:$true] %s344
      %347 = dma.vmem_to_hbm [thread:$0]  %s345, 16, %s6, [#allocation10]
    $region45: #{tpu_custom_call.1} parent=1 // pred_fallthru
      _
    // Predicated region
    $region46: #{tpu_custom_call.1} parent=1 // pred_check
      _
    $region47: #{tpu_custom_call.1} parent=1 // pred_check_branch
      %349 = sbr.rel (0) target = $region49
    $region48: #{tpu_custom_call.1} parent=1 // pred_region
      %s351 = ssub.s32 16, 16
      %352 = vsyncadd [#allocation10], %s351
      %s354 = sshll.u32 [#allocation11], 4
      %s355 = int_to_ptr.vmem [resolvable:$true] %s354
      %357 = dma.vmem_to_hbm [thread:$0]  %s355, 16, %s7, [#allocation10]
    $region49: #{tpu_custom_call.1} parent=1 // pred_fallthru
      _
    // Predicated region
    $region50: #{tpu_custom_call.1} parent=1 // pred_check
      _
    $region51: #{tpu_custom_call.1} parent=1 // pred_check_branch
      %359 = sbr.rel (0) target = $region53
    $region52: #{tpu_custom_call.1} parent=1 // pred_region
      %360 = dma.done [#allocation4], 128
    $region53: #{tpu_custom_call.1} parent=1 // pred_fallthru
      _
    // Predicated region
    $region54: #{tpu_custom_call.1} parent=1 // pred_check
      _
    $region55: #{tpu_custom_call.1} parent=1 // pred_check_branch
      %362 = sbr.rel (0) target = $region57
    $region56: #{tpu_custom_call.1} parent=1 // pred_region
      %363 = dma.done [#allocation10], 16
    $region57: #{tpu_custom_call.1} parent=1 // pred_fallthru
      _
    // Predicated region
    $region58: #{tpu_custom_call.1} parent=1 // pred_check
      _
    $region59: #{tpu_custom_call.1} parent=1 // pred_check_branch
      %365 = sbr.rel (0) target = $region61
    $region60: #{tpu_custom_call.1} parent=1 // pred_region
      %366 = dma.done [#allocation10], 16
    $region61: #{tpu_custom_call.1} parent=1 // pred_fallthru
      _
    %367 = vsyncpa [#allocation3], 1
    %368 = vsyncpa [#allocation6], 1
    %369 = vsyncpa [#allocation4], 1
    %370 = vsyncpa [#allocation10], 1

</llo_original>
